<compile_context>
chip_gen: v7x
topology: tpu7x:2x2x1
jax: 0.10.0
libtpu: 0.0.40
codegen_flags: <defaults>
</compile_context>

<pallas_src>
import math

import numpy as np

import jax
import jax.numpy as jnp
from jax.experimental import pallas as pl
from jax.experimental.pallas import tpu as pltpu

# ---- module configuration ----
C_IN = 4
C_OUT = 8
C_COND = 8
EPS = 1e-5              # torch.nn.GroupNorm default eps
H = 16
W = 16
B = 2
EMB_OUT = 2 * C_OUT     # use_scale_shift_norm=True

WC_IN = W * C_IN        # 64  : lane width of conv1 / shortcut inputs
WC_OUT = W * C_OUT      # 128 : lane width of everything after conv1

# ---- packed-parameter layout ----
# big matmul pack `wp`: (WP_ROWS, WC_OUT)
OFF_C1 = 0                          # conv1 banded mats: 3 x (WC_IN,  WC_OUT)
OFF_C2 = OFF_C1 + 3 * WC_IN         # conv2 banded mats: 3 x (WC_OUT, WC_OUT)
OFF_SC = OFF_C2 + 3 * WC_OUT        # shortcut block-diag: (WC_IN, WC_OUT)
WP_ROWS = OFF_SC + WC_IN            # 640   (conv2 + shortcut are contiguous
                                    #        so they fuse into one matmul)

# small vector pack `sp`: (SP_ROWS, WC_OUT)
ROW_WEMB_SCALE = 0                  # rows 0:8   cond_emb W (scale half), W-tiled
ROW_WEMB_SHIFT = C_COND             # rows 8:16  cond_emb W (shift half), W-tiled
ROW_BEMB_SCALE1 = 2 * C_COND        # 16  : cond_emb scale bias + 1  (AdaGN "1+scale")
ROW_BEMB_SHIFT = 2 * C_COND + 1     # 17
ROW_G1 = 18                         # lanes 0:WC_IN
ROW_BE1 = 19                        # lanes 0:WC_IN
ROW_B1 = 20
ROW_G2 = 21
ROW_BE2 = 22
ROW_B2SC = 23                       # conv2 bias + shortcut bias, pre-summed
SP_ROWS = 24


def _gelu(x):
    # exact erf-based GELU, matching torch.nn.GELU() default
    return 0.5 * x * (1.0 + jax.lax.erf(x * (1.0 / math.sqrt(2.0))))


# ----------------------------------------------------------------------------
# Kernel: one sample per grid step, everything lane-dense, no scratch.
# ----------------------------------------------------------------------------
def residual_block_kernel(x_ref, emb_ref, wp_ref, sp_ref, o_ref):
    x = x_ref[0]                                       # (H, W*C_IN) = (16, 64)

    # ---- GroupNorm1 (n_groups=1): one-pass stats over the whole sample ----
    n1 = float(H * W * C_IN)
    mean1 = jnp.sum(x) / n1
    var1 = jnp.maximum(jnp.sum(x * x) / n1 - mean1 * mean1, 0.0)
    g1 = sp_ref[ROW_G1:ROW_G1 + 1, 0:WC_IN]            # (1, 64) W-tiled gamma
    be1 = sp_ref[ROW_BE1:ROW_BE1 + 1, 0:WC_IN]
    a1 = _gelu((x - mean1) * jax.lax.rsqrt(var1 + EPS) * g1 + be1)

    # ---- conv1: single matmul, 3 vertical taps concatenated along K so the
    #      MXU accumulates them internally (no VPU adds between dots) ----
    zi = jnp.zeros((1, WC_IN), jnp.float32)
    a1p = jnp.concatenate([zi, a1, zi], axis=0)        # (H+2, W*C_IN)
    a1cat = jnp.concatenate(
        [a1p[0:H], a1p[1:H + 1], a1p[2:H + 2]], axis=1)        # (16, 192)
    h = jnp.dot(a1cat, wp_ref[OFF_C1:OFF_C1 + 3 * WC_IN, :],
                preferred_element_type=jnp.float32)
    h = h + sp_ref[ROW_B1:ROW_B1 + 1, :]               # (16, 128)

    # ---- conditioning: emb_out = Linear(emb); weights pre-tiled over W ----
    emb = emb_ref[0]                                   # (1, C_COND)
    # "1 + scale" is folded into the packed bias row (bias + 1).
    scale1 = (jnp.dot(emb, sp_ref[ROW_WEMB_SCALE:ROW_WEMB_SCALE + C_COND, :],
                      preferred_element_type=jnp.float32)
              + sp_ref[ROW_BEMB_SCALE1:ROW_BEMB_SCALE1 + 1, :])   # (1, 128)
    shift = (jnp.dot(emb, sp_ref[ROW_WEMB_SHIFT:ROW_WEMB_SHIFT + C_COND, :],
                     preferred_element_type=jnp.float32)
             + sp_ref[ROW_BEMB_SHIFT:ROW_BEMB_SHIFT + 1, :])      # (1, 128)

    # ---- AdaGN: h = norm2(h) * (1 + scale) + shift ; then GELU ----
    n2 = float(H * W * C_OUT)
    mean2 = jnp.sum(h) / n2
    var2 = jnp.maximum(jnp.sum(h * h) / n2 - mean2 * mean2, 0.0)
    hn = ((h - mean2) * jax.lax.rsqrt(var2 + EPS)
          * sp_ref[ROW_G2:ROW_G2 + 1, :] + sp_ref[ROW_BE2:ROW_BE2 + 1, :])
    a2 = _gelu(hn * scale1 + shift)                    # (16, 128)

    # ---- conv2 + 1x1 shortcut fused into ONE matmul:
    #      [tap0 | tap1 | tap2 | x] @ [W2_banded ; W_sc_blockdiag]  ----
    zo = jnp.zeros((1, WC_OUT), jnp.float32)
    a2p = jnp.concatenate([zo, a2, zo], axis=0)        # (H+2, W*C_OUT)
    a2cat = jnp.concatenate(
        [a2p[0:H], a2p[1:H + 1], a2p[2:H + 2], x], axis=1)       # (16, 448)
    out = jnp.dot(a2cat, wp_ref[OFF_C2:WP_ROWS, :],
                  preferred_element_type=jnp.float32)
    out = out + sp_ref[ROW_B2SC:ROW_B2SC + 1, :]       # b2 + b_sc (pre-summed)

    o_ref[0] = out.astype(o_ref.dtype)


# ----------------------------------------------------------------------------
# Wrapper-side parameter packing (pure layout transforms, same math).
# ----------------------------------------------------------------------------
def _expand_conv_weight(w, c_in, c_out):
    """w: (9, c_in, c_out), k = dy*3+dx  ->  (3, W*c_in, W*c_out) banded mats.

    M[dy, xs*c_in+ci, x*c_out+co] = w[dy*3+dx, ci, co] with xs = x + dx - 1,
    so that conv_out_dy = rowpad(a)[dy:dy+H, :] @ M[dy]  (zero W-padding is
    absorbed by clipping the band at the edges).
    """
    P = np.zeros((3, W, W), np.float32)
    for dx in range(3):
        for x in range(W):
            xs = x + dx - 1
            if 0 <= xs < W:
                P[dx, xs, x] = 1.0
    w4 = w.reshape(3, 3, c_in, c_out)
    M = jnp.einsum("dsx,ydio->ysixo", jnp.asarray(P), w4)
    return M.reshape(3, W * c_in, W * c_out)


def _expand_pointwise_weight(w_sc):
    """w_sc: (C_IN, C_OUT) -> block-diagonal (W*C_IN, W*C_OUT)."""
    eye = jnp.eye(W, dtype=jnp.float32)
    return jnp.einsum("xz,io->xizo", eye, w_sc).reshape(WC_IN, WC_OUT)


def _pack_params(params):
    m1 = _expand_conv_weight(params["w1"], C_IN, C_OUT).reshape(3 * WC_IN, WC_OUT)
    m2 = _expand_conv_weight(params["w2"], C_OUT, C_OUT).reshape(3 * WC_OUT, WC_OUT)
    msc = _expand_pointwise_weight(params["w_sc"])
    wp = jnp.concatenate([m1, m2, msc], axis=0).astype(jnp.float32)   # (640, 128)

    def tile_w(v):          # (C,) -> (W*C,), lane index = w*C + c
        return jnp.tile(v.reshape(-1), (W,))

    sp = jnp.zeros((SP_ROWS, WC_OUT), jnp.float32)
    sp = sp.at[ROW_WEMB_SCALE:ROW_WEMB_SCALE + C_COND, :].set(
        jnp.tile(params["w_emb"][:, :C_OUT], (1, W)))
    sp = sp.at[ROW_WEMB_SHIFT:ROW_WEMB_SHIFT + C_COND, :].set(
        jnp.tile(params["w_emb"][:, C_OUT:], (1, W)))
    # fold AdaGN's "(1 + scale)" into the scale bias row
    sp = sp.at[ROW_BEMB_SCALE1, :].set(tile_w(params["b_emb"][0, :C_OUT]) + 1.0)
    sp = sp.at[ROW_BEMB_SHIFT, :].set(tile_w(params["b_emb"][0, C_OUT:]))
    sp = sp.at[ROW_G1, :WC_IN].set(tile_w(params["g1"]))
    sp = sp.at[ROW_BE1, :WC_IN].set(tile_w(params["be1"]))
    sp = sp.at[ROW_B1, :].set(tile_w(params["b1"]))
    sp = sp.at[ROW_G2, :].set(tile_w(params["g2"]))
    sp = sp.at[ROW_BE2, :].set(tile_w(params["be2"]))
    # conv2 bias and shortcut bias are applied together after the fused matmul
    sp = sp.at[ROW_B2SC, :].set(tile_w(params["b2"]) + tile_w(params["b_sc"]))
    return wp, sp


def residual_block(x_nchw, emb, params):
    """x_nchw: (B, C_IN, H, W), emb: (B, C_COND) -> (B, C_OUT, H, W)."""
    b = x_nchw.shape[0]
    # NCHW -> lane-dense (B, H, W*C_IN)
    x_ld = (jnp.transpose(x_nchw, (0, 2, 3, 1))
            .reshape(b, H, WC_IN).astype(jnp.float32))
    emb3 = emb.reshape(b, 1, C_COND).astype(jnp.float32)
    wp, sp = _pack_params(params)

    out = pl.pallas_call(
        residual_block_kernel,
        out_shape=jax.ShapeDtypeStruct((b, H, WC_OUT), jnp.float32),
        grid_spec=pltpu.PrefetchScalarGridSpec(
            num_scalar_prefetch=0,
            grid=(b,),
            in_specs=[
                pl.BlockSpec((1, H, WC_IN), lambda i: (i, 0, 0)),    # x (lane-dense)
                pl.BlockSpec((1, 1, C_COND), lambda i: (i, 0, 0)),   # emb
                pl.BlockSpec((WP_ROWS, WC_OUT), lambda i: (0, 0)),   # matmul pack
                pl.BlockSpec((SP_ROWS, WC_OUT), lambda i: (0, 0)),   # vector pack
            ],
            out_specs=pl.BlockSpec((1, H, WC_OUT), lambda i: (i, 0, 0)),
        ),
        compiler_params=pltpu.CompilerParams(
            dimension_semantics=("parallel",)),
    )(x_ld, emb3, wp, sp)

    # lane-dense (B, H, W*C_OUT) -> NCHW
    return jnp.transpose(out.reshape(b, H, W, C_OUT), (0, 3, 1, 2))


# ---- deterministic parameter init (shapes match the torch module) ----
def init_params(key):
    ks = jax.random.split(key, 12)
    s = 0.1
    return {
        "g1":    1.0 + s * jax.random.normal(ks[0], (1, C_IN), jnp.float32),
        "be1":   s * jax.random.normal(ks[1], (1, C_IN), jnp.float32),
        "w1":    s * jax.random.normal(ks[2], (9, C_IN, C_OUT), jnp.float32),
        "b1":    s * jax.random.normal(ks[3], (1, C_OUT), jnp.float32),
        "w_emb": s * jax.random.normal(ks[4], (C_COND, EMB_OUT), jnp.float32),
        "b_emb": s * jax.random.normal(ks[5], (1, EMB_OUT), jnp.float32),
        "g2":    1.0 + s * jax.random.normal(ks[6], (1, C_OUT), jnp.float32),
        "be2":   s * jax.random.normal(ks[7], (1, C_OUT), jnp.float32),
        # NOTE: torch reset_parameters() zero-inits conv2; we use small random
        # values instead so the conv2 path is numerically exercised.
        "w2":    s * jax.random.normal(ks[8], (9, C_OUT, C_OUT), jnp.float32),
        "b2":    s * jax.random.normal(ks[9], (1, C_OUT), jnp.float32),
        "w_sc":  s * jax.random.normal(ks[10], (C_IN, C_OUT), jnp.float32),
        "b_sc":  s * jax.random.normal(ks[11], (1, C_OUT), jnp.float32),
    }


# ---- pure-JAX reference (same math, NHWC) for validation ----
def reference_forward(x_nchw, emb, params):
    x = jnp.transpose(x_nchw, (0, 2, 3, 1)).astype(jnp.float32)

    def gn(t, g, bta):
        mean = jnp.mean(t, axis=(1, 2, 3), keepdims=True)
        var = jnp.mean((t - mean) ** 2, axis=(1, 2, 3), keepdims=True)
        return ((t - mean) * jax.lax.rsqrt(var + EPS)
                * g.reshape(1, 1, 1, -1) + bta.reshape(1, 1, 1, -1))

    def conv3x3(t, w, bias):
        wh = w.reshape(3, 3, w.shape[1], w.shape[2])
        y = jax.lax.conv_general_dilated(
            t, wh, window_strides=(1, 1), padding="SAME",
            dimension_numbers=("NHWC", "HWIO", "NHWC"))
        return y + bias.reshape(1, 1, 1, -1)

    h = conv3x3(_gelu(gn(x, params["g1"], params["be1"])),
                params["w1"], params["b1"])
    emb_out = (emb @ params["w_emb"] + params["b_emb"])[:, None, None, :]
    scale, shift = emb_out[..., :C_OUT], emb_out[..., C_OUT:]
    h = gn(h, params["g2"], params["be2"]) * (1.0 + scale) + shift
    h = conv3x3(_gelu(h), params["w2"], params["b2"])
    sc = (jnp.einsum("bhwc,cd->bhwd", x, params["w_sc"])
          + params["b_sc"].reshape(1, 1, 1, -1))
    return jnp.transpose(h + sc, (0, 3, 1, 2))


if __name__ == "__main__":
    key = jax.random.PRNGKey(0)
    kx, ke, kp = jax.random.split(key, 3)
    x = jax.random.normal(kx, (B, C_IN, H, W), jnp.float32)   # NCHW (torch-style)
    emb = jax.random.normal(ke, (B, C_COND), jnp.float32)
    params = init_params(kp)

    out = residual_block(x, emb, params)
    out = jax.block_until_ready(out)
    assert out.shape == (B, C_OUT, H, W)

    ref = reference_forward(x, emb, params)
    max_err = float(jnp.max(jnp.abs(out - ref)))
    assert max_err < 5e-3, f"max abs error {max_err}"

    print("KERNEL_OK")
</pallas_src>

<mosaic_0001>
module attributes {stable_mosaic.version = 11 : i64} {
  func.func @residual_block_kernel(%arg0: i32, %arg1: memref<1x16x64xf32, #tpu.memory_space<vmem>>, %arg2: memref<1x1x8xf32, #tpu.memory_space<vmem>>, %arg3: memref<640x128xf32, #tpu.memory_space<vmem>>, %arg4: memref<24x128xf32, #tpu.memory_space<vmem>>, %arg5: memref<1x16x128xf32, #tpu.memory_space<vmem>>) attributes {dimension_semantics = [#tpu.dimension_semantics<parallel>], iteration_bounds = array<i64: 2>, scalar_prefetch = 0 : i64, scratch_operands = 0 : i64, tpu.core_type = #tpu.core_type<tc>, window_params = [{transform_indices = @transform_0, window_bounds = array<i64: 1, 16, 64>}, {transform_indices = @transform_1, window_bounds = array<i64: 1, 1, 8>}, {pipeline_mode = #tpu.pipeline_mode<synchronous>, transform_indices = @transform_2, window_bounds = array<i64: 640, 128>}, {pipeline_mode = #tpu.pipeline_mode<synchronous>, transform_indices = @transform_3, window_bounds = array<i64: 24, 128>}, {transform_indices = @transform_4, window_bounds = array<i64: 1, 16, 128>}]} {
    %c0 = arith.constant 0 : index
    %c0_0 = arith.constant 0 : index
    %c0_1 = arith.constant 0 : index
    %0 = vector.load %arg1[%c0, %c0_0, %c0_1] : memref<1x16x64xf32, #tpu.memory_space<vmem>>, vector<1x16x64xf32>
    %1 = vector.shape_cast %0 : vector<1x16x64xf32> to vector<16x64xf32>
    %2 = vector.shape_cast %1 : vector<16x64xf32> to vector<1x16x64xf32>
    %cst = arith.constant dense<0.000000e+00> : vector<1xf32>
    %3 = vector.multi_reduction <add>, %2, %cst [1, 2] : vector<1x16x64xf32> to vector<1xf32>
    %4 = vector.shape_cast %3 : vector<1xf32> to vector<1x1x1xf32>
    %5 = vector.extract %4[0, 0, 0] : f32 from vector<1x1x1xf32>
    %cst_2 = arith.constant 1.024000e+03 : f32
    %6 = arith.divf %5, %cst_2 : f32
    %7 = arith.mulf %1, %1 : vector<16x64xf32>
    %8 = vector.shape_cast %7 : vector<16x64xf32> to vector<1x16x64xf32>
    %cst_3 = arith.constant dense<0.000000e+00> : vector<1xf32>
    %9 = vector.multi_reduction <add>, %8, %cst_3 [1, 2] : vector<1x16x64xf32> to vector<1xf32>
    %10 = vector.shape_cast %9 : vector<1xf32> to vector<1x1x1xf32>
    %11 = vector.extract %10[0, 0, 0] : f32 from vector<1x1x1xf32>
    %cst_4 = arith.constant 1.024000e+03 : f32
    %12 = arith.divf %11, %cst_4 : f32
    %13 = arith.mulf %6, %6 : f32
    %14 = arith.subf %12, %13 : f32
    %cst_5 = arith.constant 0.000000e+00 : f32
    %15 = arith.maximumf %14, %cst_5 : f32
    %c18 = arith.constant 18 : index
    %c0_6 = arith.constant 0 : index
    %16 = vector.load %arg4[%c18, %c0_6] : memref<24x128xf32, #tpu.memory_space<vmem>>, vector<1x64xf32>
    %c19 = arith.constant 19 : index
    %c0_7 = arith.constant 0 : index
    %17 = vector.load %arg4[%c19, %c0_7] : memref<24x128xf32, #tpu.memory_space<vmem>>, vector<1x64xf32>
    %18 = vector.broadcast %6 : f32 to vector<16x64xf32>
    %19 = arith.subf %1, %18 : vector<16x64xf32>
    %cst_8 = arith.constant 9.99999974E-6 : f32
    %20 = arith.addf %15, %cst_8 : f32
    %21 = math.rsqrt %20 : f32
    %22 = vector.broadcast %21 : f32 to vector<16x64xf32>
    %23 = arith.mulf %19, %22 : vector<16x64xf32>
    %24 = vector.broadcast %16 : vector<1x64xf32> to vector<16x64xf32>
    %25 = arith.mulf %23, %24 : vector<16x64xf32>
    %26 = vector.broadcast %17 : vector<1x64xf32> to vector<16x64xf32>
    %27 = arith.addf %25, %26 : vector<16x64xf32>
    %cst_9 = arith.constant 5.000000e-01 : f32
    %28 = vector.broadcast %cst_9 : f32 to vector<16x64xf32>
    %29 = arith.mulf %28, %27 : vector<16x64xf32>
    %cst_10 = arith.constant 0.707106769 : f32
    %30 = vector.broadcast %cst_10 : f32 to vector<16x64xf32>
    %31 = arith.mulf %27, %30 : vector<16x64xf32>
    %32 = math.erf %31 : vector<16x64xf32>
    %cst_11 = arith.constant 1.000000e+00 : f32
    %33 = vector.broadcast %cst_11 : f32 to vector<16x64xf32>
    %34 = arith.addf %33, %32 : vector<16x64xf32>
    %35 = arith.mulf %29, %34 : vector<16x64xf32>
    %cst_12 = arith.constant 0.000000e+00 : f32
    %36 = vector.broadcast %cst_12 : f32 to vector<1x64xf32>
    %37 = tpu.concatenate %36, %35, %36 in 0 : vector<1x64xf32>, vector<16x64xf32>, vector<1x64xf32> -> vector<18x64xf32>
    %38 = vector.extract_strided_slice %37 {offsets = [0, 0], sizes = [16, 64], strides = [1, 1]} : vector<18x64xf32> to vector<16x64xf32>
    %39 = vector.extract_strided_slice %37 {offsets = [1, 0], sizes = [16, 64], strides = [1, 1]} : vector<18x64xf32> to vector<16x64xf32>
    %40 = vector.extract_strided_slice %37 {offsets = [2, 0], sizes = [16, 64], strides = [1, 1]} : vector<18x64xf32> to vector<16x64xf32>
    %41 = tpu.concatenate %38, %39, %40 in 1 : vector<16x64xf32>, vector<16x64xf32>, vector<16x64xf32> -> vector<16x192xf32>
    %c0_13 = arith.constant 0 : index
    %c0_14 = arith.constant 0 : index
    %42 = vector.load %arg3[%c0_13, %c0_14] : memref<640x128xf32, #tpu.memory_space<vmem>>, vector<192x128xf32>
    %cst_15 = arith.constant dense<0.000000e+00> : vector<16x128xf32>
    %43 = tpu.matmul %41, %42, %cst_15 {dimension_numbers = #tpu.dot_dimension_numbers<[1], [0], [0], [1], [0, 0, 1, 1], [], []>} : vector<16x192xf32>, vector<192x128xf32>, vector<16x128xf32> -> vector<16x128xf32>
    %c20 = arith.constant 20 : index
    %c0_16 = arith.constant 0 : index
    %44 = vector.load %arg4[%c20, %c0_16] : memref<24x128xf32, #tpu.memory_space<vmem>>, vector<1x128xf32>
    %45 = vector.broadcast %44 : vector<1x128xf32> to vector<16x128xf32>
    %46 = arith.addf %43, %45 : vector<16x128xf32>
    %c0_17 = arith.constant 0 : index
    %c0_18 = arith.constant 0 : index
    %c0_19 = arith.constant 0 : index
    %47 = vector.load %arg2[%c0_17, %c0_18, %c0_19] : memref<1x1x8xf32, #tpu.memory_space<vmem>>, vector<1x1x8xf32>
    %48 = vector.shape_cast %47 : vector<1x1x8xf32> to vector<1x8xf32>
    %c0_20 = arith.constant 0 : index
    %c0_21 = arith.constant 0 : index
    %49 = vector.load %arg4[%c0_20, %c0_21] : memref<24x128xf32, #tpu.memory_space<vmem>>, vector<8x128xf32>
    %cst_22 = arith.constant dense<0.000000e+00> : vector<1x128xf32>
    %50 = tpu.matmul %48, %49, %cst_22 {dimension_numbers = #tpu.dot_dimension_numbers<[1], [0], [0], [1], [0, 0, 1, 1], [], []>} : vector<1x8xf32>, vector<8x128xf32>, vector<1x128xf32> -> vector<1x128xf32>
    %c16 = arith.constant 16 : index
    %c0_23 = arith.constant 0 : index
    %51 = vector.load %arg4[%c16, %c0_23] : memref<24x128xf32, #tpu.memory_space<vmem>>, vector<1x128xf32>
    %52 = arith.addf %50, %51 : vector<1x128xf32>
    %c8 = arith.constant 8 : index
    %c0_24 = arith.constant 0 : index
    %53 = vector.load %arg4[%c8, %c0_24] : memref<24x128xf32, #tpu.memory_space<vmem>>, vector<8x128xf32>
    %cst_25 = arith.constant dense<0.000000e+00> : vector<1x128xf32>
    %54 = tpu.matmul %48, %53, %cst_25 {dimension_numbers = #tpu.dot_dimension_numbers<[1], [0], [0], [1], [0, 0, 1, 1], [], []>} : vector<1x8xf32>, vector<8x128xf32>, vector<1x128xf32> -> vector<1x128xf32>
    %c17 = arith.constant 17 : index
    %c0_26 = arith.constant 0 : index
    %55 = vector.load %arg4[%c17, %c0_26] : memref<24x128xf32, #tpu.memory_space<vmem>>, vector<1x128xf32>
    %56 = arith.addf %54, %55 : vector<1x128xf32>
    %57 = vector.shape_cast %46 : vector<16x128xf32> to vector<1x16x128xf32>
    %cst_27 = arith.constant dense<0.000000e+00> : vector<1xf32>
    %58 = vector.multi_reduction <add>, %57, %cst_27 [1, 2] : vector<1x16x128xf32> to vector<1xf32>
    %59 = vector.shape_cast %58 : vector<1xf32> to vector<1x1x1xf32>
    %60 = vector.extract %59[0, 0, 0] : f32 from vector<1x1x1xf32>
    %cst_28 = arith.constant 2.048000e+03 : f32
    %61 = arith.divf %60, %cst_28 : f32
    %62 = arith.mulf %46, %46 : vector<16x128xf32>
    %63 = vector.shape_cast %62 : vector<16x128xf32> to vector<1x16x128xf32>
    %cst_29 = arith.constant dense<0.000000e+00> : vector<1xf32>
    %64 = vector.multi_reduction <add>, %63, %cst_29 [1, 2] : vector<1x16x128xf32> to vector<1xf32>
    %65 = vector.shape_cast %64 : vector<1xf32> to vector<1x1x1xf32>
    %66 = vector.extract %65[0, 0, 0] : f32 from vector<1x1x1xf32>
    %cst_30 = arith.constant 2.048000e+03 : f32
    %67 = arith.divf %66, %cst_30 : f32
    %68 = arith.mulf %61, %61 : f32
    %69 = arith.subf %67, %68 : f32
    %cst_31 = arith.constant 0.000000e+00 : f32
    %70 = arith.maximumf %69, %cst_31 : f32
    %71 = vector.broadcast %61 : f32 to vector<16x128xf32>
    %72 = arith.subf %46, %71 : vector<16x128xf32>
    %cst_32 = arith.constant 9.99999974E-6 : f32
    %73 = arith.addf %70, %cst_32 : f32
    %74 = math.rsqrt %73 : f32
    %75 = vector.broadcast %74 : f32 to vector<16x128xf32>
    %76 = arith.mulf %72, %75 : vector<16x128xf32>
    %c21 = arith.constant 21 : index
    %c0_33 = arith.constant 0 : index
    %77 = vector.load %arg4[%c21, %c0_33] : memref<24x128xf32, #tpu.memory_space<vmem>>, vector<1x128xf32>
    %78 = vector.broadcast %77 : vector<1x128xf32> to vector<16x128xf32>
    %79 = arith.mulf %76, %78 : vector<16x128xf32>
    %c22 = arith.constant 22 : index
    %c0_34 = arith.constant 0 : index
    %80 = vector.load %arg4[%c22, %c0_34] : memref<24x128xf32, #tpu.memory_space<vmem>>, vector<1x128xf32>
    %81 = vector.broadcast %80 : vector<1x128xf32> to vector<16x128xf32>
    %82 = arith.addf %79, %81 : vector<16x128xf32>
    %83 = vector.broadcast %52 : vector<1x128xf32> to vector<16x128xf32>
    %84 = arith.mulf %82, %83 : vector<16x128xf32>
    %85 = vector.broadcast %56 : vector<1x128xf32> to vector<16x128xf32>
    %86 = arith.addf %84, %85 : vector<16x128xf32>
    %cst_35 = arith.constant 5.000000e-01 : f32
    %87 = vector.broadcast %cst_35 : f32 to vector<16x128xf32>
    %88 = arith.mulf %87, %86 : vector<16x128xf32>
    %cst_36 = arith.constant 0.707106769 : f32
    %89 = vector.broadcast %cst_36 : f32 to vector<16x128xf32>
    %90 = arith.mulf %86, %89 : vector<16x128xf32>
    %91 = math.erf %90 : vector<16x128xf32>
    %cst_37 = arith.constant 1.000000e+00 : f32
    %92 = vector.broadcast %cst_37 : f32 to vector<16x128xf32>
    %93 = arith.addf %92, %91 : vector<16x128xf32>
    %94 = arith.mulf %88, %93 : vector<16x128xf32>
    %cst_38 = arith.constant 0.000000e+00 : f32
    %95 = vector.broadcast %cst_38 : f32 to vector<1x128xf32>
    %96 = tpu.concatenate %95, %94, %95 in 0 : vector<1x128xf32>, vector<16x128xf32>, vector<1x128xf32> -> vector<18x128xf32>
    %97 = vector.extract_strided_slice %96 {offsets = [0, 0], sizes = [16, 128], strides = [1, 1]} : vector<18x128xf32> to vector<16x128xf32>
    %98 = vector.extract_strided_slice %96 {offsets = [1, 0], sizes = [16, 128], strides = [1, 1]} : vector<18x128xf32> to vector<16x128xf32>
    %99 = vector.extract_strided_slice %96 {offsets = [2, 0], sizes = [16, 128], strides = [1, 1]} : vector<18x128xf32> to vector<16x128xf32>
    %100 = tpu.concatenate %97, %98, %99, %1 in 1 : vector<16x128xf32>, vector<16x128xf32>, vector<16x128xf32>, vector<16x64xf32> -> vector<16x448xf32>
    %c192 = arith.constant 192 : index
    %c0_39 = arith.constant 0 : index
    %101 = vector.load %arg3[%c192, %c0_39] : memref<640x128xf32, #tpu.memory_space<vmem>>, vector<448x128xf32>
    %cst_40 = arith.constant dense<0.000000e+00> : vector<16x128xf32>
    %102 = tpu.matmul %100, %101, %cst_40 {dimension_numbers = #tpu.dot_dimension_numbers<[1], [0], [0], [1], [0, 0, 1, 1], [], []>} : vector<16x448xf32>, vector<448x128xf32>, vector<16x128xf32> -> vector<16x128xf32>
    %c23 = arith.constant 23 : index
    %c0_41 = arith.constant 0 : index
    %103 = vector.load %arg4[%c23, %c0_41] : memref<24x128xf32, #tpu.memory_space<vmem>>, vector<1x128xf32>
    %104 = vector.broadcast %103 : vector<1x128xf32> to vector<16x128xf32>
    %105 = arith.addf %102, %104 : vector<16x128xf32>
    %c0_42 = arith.constant 0 : index
    %c0_43 = arith.constant 0 : index
    %c0_44 = arith.constant 0 : index
    %106 = vector.load %arg5[%c0_42, %c0_43, %c0_44] : memref<1x16x128xf32, #tpu.memory_space<vmem>>, vector<1x16x128xf32>
    %107 = vector.shape_cast %106 : vector<1x16x128xf32> to vector<16x128xf32>
    %108 = vector.shape_cast %105 : vector<16x128xf32> to vector<1x16x128xf32>
    tpu.vector_store %arg5[%c0_42, %c0_43, %c0_44], %108 {strides = array<i32>} : memref<1x16x128xf32, #tpu.memory_space<vmem>>, vector<1x16x128xf32>,
    return
  }
  func.func @transform_0(%arg0: i32) -> (i32, i32, i32) {
    %c0_i32 = arith.constant 0 : i32
    %c0_i32_0 = arith.constant 0 : i32
    %c0_i32_1 = arith.constant 0 : i32
    return %arg0, %c0_i32, %c0_i32_0 : i32, i32, i32
  }
  func.func @transform_1(%arg0: i32) -> (i32, i32, i32) {
    %c0_i32 = arith.constant 0 : i32
    %c0_i32_0 = arith.constant 0 : i32
    %c0_i32_1 = arith.constant 0 : i32
    return %arg0, %c0_i32, %c0_i32_0 : i32, i32, i32
  }
  func.func @transform_2(%arg0: i32) -> (i32, i32) {
    %c0_i32 = arith.constant 0 : i32
    %c0_i32_0 = arith.constant 0 : i32
    %c0_i32_1 = arith.constant 0 : i32
    return %c0_i32, %c0_i32_0 : i32, i32
  }
  func.func @transform_3(%arg0: i32) -> (i32, i32) {
    %c0_i32 = arith.constant 0 : i32
    %c0_i32_0 = arith.constant 0 : i32
    %c0_i32_1 = arith.constant 0 : i32
    return %c0_i32, %c0_i32_0 : i32, i32
  }
  func.func @transform_4(%arg0: i32) -> (i32, i32, i32) {
    %c0_i32 = arith.constant 0 : i32
    %c0_i32_0 = arith.constant 0 : i32
    %c0_i32_1 = arith.constant 0 : i32
    return %arg0, %c0_i32, %c0_i32_0 : i32, i32, i32
  }
}

</mosaic_0001>

<llo_original>
// kernel: tpu_custom_call.1
$region0: #{tpu_custom_call.1}
  #allocation0 [shape = 'u32[]', space=smem, size = 0x4, offset = 0x4, fixed_abs, tag = 'smem constant byte address 0x4 - core index']
  #allocation1 [shape = 'u32[144,128]{1,0:T(1,128)}', space=vmem, size = 0x12000, scoped, tag = 'internal scratch']
  %s0 = inlined_call_operand.hbm [shape: f32[2,16,64], index: 0, kind: input, shape index: {}]
  %s1 = inlined_call_operand.vmem [shape: f32[2,1,8], index: 1, kind: input, shape index: {}]
  %s2 = inlined_call_operand.hbm [shape: f32[640,128], index: 2, kind: input, shape index: {}]
  %s3 = inlined_call_operand.hbm [shape: f32[24,128], index: 3, kind: input, shape index: {}]
  %s4 = inlined_call_operand.hbm [shape: f32[2,16,128], index: 4, kind: output, shape index: {}]
  %s5 = sld [smem:[#allocation0]]
  $region61: #{tpu_custom_call.1} parent=0
    _
  %s7 = ssub.s32 1, %s5
  %s8 = scalar_select 0, %s7, %s5
  $region1: #{tpu_custom_call.1} parent=0
    #allocation2 [shape = 'u8[16384]{0}', space=vmem, size = 0x4000, scoped, tag = 'input window, operand 0']
    #allocation3 [shape = 's32[2]{0}', space=sflag, size = 0x8, scoped, tag = 'scoped memory for tpu_custom_call.1']
    #allocation4 [shape = 's32[2]{0}', space=sflag, size = 0x8, scoped, tag = 'scoped memory for tpu_custom_call.1']
    #allocation5 [shape = 'u8[327680]{0}', space=vmem, size = 0x50000, scoped, tag = 'input window, operand 2, single buffered']
    #allocation6 [shape = 's32[1]{0}', space=sflag, size = 0x4, scoped, tag = 'scoped memory for tpu_custom_call.1']
    #allocation7 [shape = 'u8[12288]{0}', space=vmem, size = 0x3000, scoped, tag = 'input window, operand 3, single buffered']
    #allocation8 [shape = 'u8[16384]{0}', space=vmem, size = 0x4000, scoped, tag = 'output window, operand 0']
    %9 = vsyncpa [#allocation3], 0
    %s10 = scalar_lea.sflag [#allocation3], 1
    %11 = vsyncpa %s10, 0
    %12 = vsyncpa [#allocation6], 0
    %13 = vsyncpa [#allocation4], 0
    %s14 = scalar_lea.sflag [#allocation4], 1
    %15 = vsyncpa %s14, 0
    loop: start=0, step=1, limit=4
    $region2: #{tpu_custom_call.1} parent=1 // loop_pre_header
      _
    $region3: #{tpu_custom_call.1} parent=1 // loop_header
      %s17 = sphi 0, %s21
      %p18 = scmp.ge.s32.totalorder %s17, 4
      %s27 = sphi 0, %s29
      %s30 = sphi 0, %s27
      %s31 = sphi 0, %s30
      %s47 = sphi 0, %s31
      %s53 = sphi 0, %s55
      %s56 = sphi 0, %s53
      %s57 = sphi 0, %s56
      %s73 = sphi 0, %s57
      %s77 = sphi 0, %s77
      %s79 = sphi 0, %s77
      %s80 = sphi 0, %s79
      %s94 = sphi 0, %s80
      %s98 = sphi 0, %s98
      %s100 = sphi 0, %s98
      %s101 = sphi 0, %s100
      %s115 = sphi 0, %s101
      %s121 = sphi 0, %s123
      %s124 = sphi 0, %s121
      %s125 = sphi 0, %s124
      %s141 = sphi 0, %s125
    $region4: #{tpu_custom_call.1} parent=1 // loop_header_branch
      %20 = sbr.rel (%p18) target = $region8
    $region5: #{tpu_custom_call.1} parent=1 // loop_body
      %s22 = ssub.s32 %s17, 1
      %s23 = ssub.s32 %s17, 2
      %s24 = sadd.s32 %s17, 1
      %s25 = ssub.s32 %s17, %s24
      %p26 = scmp.eq.s32.totalorder %s25, 0
      %s28 = sadd.s32 %s27, 1
      %s29 = scalar_select %p26, %s27, %s28
      %p32 = pneg %p26
      %p33 = scmp.eq.s32.totalorder %s17, 1
      %p34 = por %p32, %p33
      %p35 = scmp.ne.s32.totalorder %s27, %s30
      %p36 = scmp.eq.s32.totalorder %s17, 0
      %p37 = por %p35, %p36
      %p38 = scmp.ne.s32.totalorder %s27, %s30
      %p39 = scmp.eq.s32.totalorder %s22, 1
      %p40 = por %p38, %p39
      %p41 = scmp.ne.s32.totalorder %s30, %s31
      %p42 = scmp.eq.s32.totalorder %s22, 0
      %p43 = por %p41, %p42
      %p44 = scmp.ne.s32.totalorder %s30, %s31
      %p45 = scmp.eq.s32.totalorder %s23, 1
      %p46 = por %p44, %p45
      %p48 = scmp.ne.s32.totalorder %s31, %s47
      %p49 = scmp.eq.s32.totalorder %s23, 0
      %p50 = por %p48, %p49
      %s51 = ssub.s32 %s17, %s24
      %p52 = scmp.eq.s32.totalorder %s51, 0
      %s54 = sadd.s32 %s53, 1
      %s55 = scalar_select %p52, %s53, %s54
      %p58 = pneg %p52
      %p59 = scmp.eq.s32.totalorder %s17, 1
      %p60 = por %p58, %p59
      %p61 = scmp.ne.s32.totalorder %s53, %s56
      %p62 = scmp.eq.s32.totalorder %s17, 0
      %p63 = por %p61, %p62
      %p64 = scmp.ne.s32.totalorder %s53, %s56
      %p65 = scmp.eq.s32.totalorder %s22, 1
      %p66 = por %p64, %p65
      %p67 = scmp.ne.s32.totalorder %s56, %s57
      %p68 = scmp.eq.s32.totalorder %s22, 0
      %p69 = por %p67, %p68
      %p70 = scmp.ne.s32.totalorder %s56, %s57
      %p71 = scmp.eq.s32.totalorder %s23, 1
      %p72 = por %p70, %p71
      %p74 = scmp.ne.s32.totalorder %s57, %s73
      %p75 = scmp.eq.s32.totalorder %s23, 0
      %p76 = por %p74, %p75
      %s78 = sadd.s32 %s77, 1
      %p81 = scmp.eq.s32.totalorder %s17, 1
      %p82 = scmp.ne.s32.totalorder %s77, %s79
      %p83 = scmp.eq.s32.totalorder %s17, 0
      %p84 = por %p82, %p83
      %p85 = scmp.ne.s32.totalorder %s77, %s79
      %p86 = scmp.eq.s32.totalorder %s22, 1
      %p87 = por %p85, %p86
      %p88 = scmp.ne.s32.totalorder %s79, %s80
      %p89 = scmp.eq.s32.totalorder %s22, 0
      %p90 = por %p88, %p89
      %p91 = scmp.ne.s32.totalorder %s79, %s80
      %p92 = scmp.eq.s32.totalorder %s23, 1
      %p93 = por %p91, %p92
      %p95 = scmp.ne.s32.totalorder %s80, %s94
      %p96 = scmp.eq.s32.totalorder %s23, 0
      %p97 = por %p95, %p96
      %s99 = sadd.s32 %s98, 1
      %p102 = scmp.eq.s32.totalorder %s17, 1
      %p103 = scmp.ne.s32.totalorder %s98, %s100
      %p104 = scmp.eq.s32.totalorder %s17, 0
      %p105 = por %p103, %p104
      %p106 = scmp.ne.s32.totalorder %s98, %s100
      %p107 = scmp.eq.s32.totalorder %s22, 1
      %p108 = por %p106, %p107
      %p109 = scmp.ne.s32.totalorder %s100, %s101
      %p110 = scmp.eq.s32.totalorder %s22, 0
      %p111 = por %p109, %p110
      %p112 = scmp.ne.s32.totalorder %s100, %s101
      %p113 = scmp.eq.s32.totalorder %s23, 1
      %p114 = por %p112, %p113
      %p116 = scmp.ne.s32.totalorder %s101, %s115
      %p117 = scmp.eq.s32.totalorder %s23, 0
      %p118 = por %p116, %p117
      %s119 = ssub.s32 %s17, %s24
      %p120 = scmp.eq.s32.totalorder %s119, 0
      %s122 = sadd.s32 %s121, 1
      %s123 = scalar_select %p120, %s121, %s122
      %p126 = pneg %p120
      %p127 = scmp.eq.s32.totalorder %s17, 1
      %p128 = por %p126, %p127
      %p129 = scmp.ne.s32.totalorder %s121, %s124
      %p130 = scmp.eq.s32.totalorder %s17, 0
      %p131 = por %p129, %p130
      %p132 = scmp.ne.s32.totalorder %s121, %s124
      %p133 = scmp.eq.s32.totalorder %s22, 1
      %p134 = por %p132, %p133
      %p135 = scmp.ne.s32.totalorder %s124, %s125
      %p136 = scmp.eq.s32.totalorder %s22, 0
      %p137 = por %p135, %p136
      %p138 = scmp.ne.s32.totalorder %s124, %s125
      %p139 = scmp.eq.s32.totalorder %s23, 1
      %p140 = por %p138, %p139
      %p142 = scmp.ne.s32.totalorder %s125, %s141
      %p143 = scmp.eq.s32.totalorder %s23, 0
      %p144 = por %p142, %p143
      %p145 = scmp.le.s32.totalorder 1, %s17
      %p146 = scmp.lt.s32.totalorder %s17, 3
      %p147 = pnand %p145, %p146
      %p148 = pneg %p147
      // Predicated region
      $region9: #{tpu_custom_call.1} parent=5 // pred_check
        _
      $region10: #{tpu_custom_call.1} parent=5 // pred_check_branch
        %150 = sbr.rel (%p147) target = $region12
      $region11: #{tpu_custom_call.1} parent=5 // pred_region
        %s151 = ssub.s32 %s17, 1
        // Predicated region
        $region13: #{tpu_custom_call.1} parent=11 // pred_check
          %p152 = pneg %p90
        $region14: #{tpu_custom_call.1} parent=11 // pred_check_branch
          %154 = sbr.rel (%p152) target = $region16
        $region15: #{tpu_custom_call.1} parent=11 // pred_region
          %s156 = ssub.s32 10240, 10240
          %157 = vsyncadd [#allocation6], %s156
          %s158 = sshll.u32 [#allocation5], 4
          %s159 = int_to_ptr.vmem [resolvable:$true] %s158
          %164 = dma.hbm_to_vmem [thread:$0]  %s2, 10240, %s159, [#allocation6], 128, 128, 8
        $region16: #{tpu_custom_call.1} parent=11 // pred_fallthru
          _
        // Predicated region
        $region17: #{tpu_custom_call.1} parent=11 // pred_check
          %p165 = pneg %p111
        $region18: #{tpu_custom_call.1} parent=11 // pred_check_branch
          %167 = sbr.rel (%p165) target = $region20
        $region19: #{tpu_custom_call.1} parent=11 // pred_region
          %s169 = ssub.s32 384, 384
          %170 = vsyncadd [#allocation6], %s169
          %s171 = sshll.u32 [#allocation7], 4
          %s172 = int_to_ptr.vmem [resolvable:$true] %s171
          %177 = dma.hbm_to_vmem [thread:$0]  %s3, 384, %s172, [#allocation6], 128, 128, 8
        $region20: #{tpu_custom_call.1} parent=11 // pred_fallthru
          _
      $region12: #{tpu_custom_call.1} parent=5 // pred_fallthru
        _
      %p178 = scmp.lt.s32.totalorder %s17, 2
      // Predicated region
      $region21: #{tpu_custom_call.1} parent=5 // pred_check
        %p179 = pneg %p178
      $region22: #{tpu_custom_call.1} parent=5 // pred_check_branch
        %181 = sbr.rel (%p179) target = $region24
      $region23: #{tpu_custom_call.1} parent=5 // pred_region
        // Predicated region
        $region25: #{tpu_custom_call.1} parent=23 // pred_check
          %p182 = pneg %p37
        $region26: #{tpu_custom_call.1} parent=23 // pred_check_branch
          %184 = sbr.rel (%p182) target = $region28
        $region27: #{tpu_custom_call.1} parent=23 // pred_region
          %s185 = sand.u32 %s27, 1
          %s186 = scalar_lea.sflag [#allocation3], %s185
          %s187 = sand.u32 %s27, 1
          %s188 = smul.addr %s187, 16
          %s189 = scalar_lea.vmem [#allocation2], %s188
          %s191 = ssub.s32 256, 256
          %192 = vsyncadd %s186, %s191
          %s193 = smul.addr %s17, 2
          %s194 = smul.addr %s193, 128
          %s195 = scalar_lea.hbm %s0, %s194
          %s196 = sshll.u32 %s189, 4
          %s197 = int_to_ptr.vmem [resolvable:$true] %s196
          %202 = dma.hbm_to_vmem [thread:$0]  %s195, 256, %s197, %s186, 128, 128, 8
        $region28: #{tpu_custom_call.1} parent=23 // pred_fallthru
          _
        // Predicated region
        $region29: #{tpu_custom_call.1} parent=23 // pred_check
          %p203 = pneg %p63
        $region30: #{tpu_custom_call.1} parent=23 // pred_check_branch
          %205 = sbr.rel (%p203) target = $region32
        $region31: #{tpu_custom_call.1} parent=23 // pred_region
          %p206 = scmp.lt.s32.totalorder %s17, 1
          %s207 = scalar_select %p206, %s17, 1
          %s208 = scalar_lea.vmem %s1, %s207
        $region32: #{tpu_custom_call.1} parent=23 // pred_fallthru
          _
      $region24: #{tpu_custom_call.1} parent=5 // pred_fallthru
        _
      %p209 = scmp.le.s32.totalorder 1, %s17
      %p210 = scmp.lt.s32.totalorder %s17, 3
      %p211 = pnand %p209, %p210
      %p212 = pneg %p211
      // Predicated region
      $region33: #{tpu_custom_call.1} parent=5 // pred_check
        _
      $region34: #{tpu_custom_call.1} parent=5 // pred_check_branch
        %214 = sbr.rel (%p211) target = $region36
      $region35: #{tpu_custom_call.1} parent=5 // pred_region
        %s215 = ssub.s32 %s17, 1
        %s216 = sand.u32 %s30, 1
        %s217 = scalar_lea.sflag [#allocation3], %s216
        %s218 = sand.u32 %s30, 1
        %s219 = smul.addr %s218, 16
        %s220 = scalar_lea.vmem [#allocation2], %s219
        // Predicated region
        $region37: #{tpu_custom_call.1} parent=35 // pred_check
          %p221 = pneg %p43
        $region38: #{tpu_custom_call.1} parent=35 // pred_check_branch
          %223 = sbr.rel (%p221) target = $region40
        $region39: #{tpu_custom_call.1} parent=35 // pred_region
          %224 = dma.done %s217, 256
        $region40: #{tpu_custom_call.1} parent=35 // pred_fallthru
          _
        // Predicated region
        $region41: #{tpu_custom_call.1} parent=35 // pred_check
          %p225 = pneg %p90
        $region42: #{tpu_custom_call.1} parent=35 // pred_check_branch
          %227 = sbr.rel (%p225) target = $region44
        $region43: #{tpu_custom_call.1} parent=35 // pred_region
          %228 = dma.done [#allocation6], 10240
        $region44: #{tpu_custom_call.1} parent=35 // pred_fallthru
          _
        // Predicated region
        $region45: #{tpu_custom_call.1} parent=35 // pred_check
          %p229 = pneg %p111
        $region46: #{tpu_custom_call.1} parent=35 // pred_check_branch
          %231 = sbr.rel (%p229) target = $region48
        $region47: #{tpu_custom_call.1} parent=35 // pred_region
          %232 = dma.done [#allocation6], 384
        $region48: #{tpu_custom_call.1} parent=35 // pred_fallthru
          _
        %s233 = sand.u32 %s30, 1
        %s234 = scalar_lea.sflag [#allocation3], %s233
        %s235 = sand.u32 %s30, 1
        %s236 = smul.addr %s235, 16
        %s237 = scalar_lea.vmem [#allocation2], %s236
        %p238 = pneg %p43
        %p239 = pneg %p40
        %p240 = scmp.lt.s32.totalorder %s22, 1
        %s241 = scalar_select %p240, %s22, 1
        %s242 = scalar_lea.vmem %s1, %s241
        %p243 = pneg %p69
        %p244 = pneg %p66
        %p245 = pneg %p90
        %p246 = pneg %p87
        %p247 = pneg %p111
        %p248 = pneg %p108
        %p249 = pneg %p137
        %p250 = pneg %p134
        %s251 = sand.u32 %s124, 1
        %s252 = scalar_lea.sflag [#allocation4], %s251
        %s253 = sand.u32 %s124, 1
        %s254 = smul.addr %s253, 16
        %s255 = scalar_lea.vmem [#allocation8], %s254
        %p256 = scmp.lt.s32.totalorder %s22, 1
        %s257 = scalar_select %p256, %s22, 1
        %s258 = scalar_lea.vmem %s1, %s257
        %v259 = vld [vmem:[%s220] sm:$0xff]
        %v260 = vld [vmem:[%s220 + $0x8] sm:$0xff]
        %vm261 = vcmask 523264
        %v262 = vsel %vm261, %v259, 0.0
        %v263 = vsel %vm261, %v260, 0.0
        %v264 = vadd.f32 %v262, %v263
        %265 = vadd.xlane.f32.xlu0 %v264
        %v266 = vpop.xlane.xlu0 %265
        %v267 = vrot.slane %v266, 4
        %v268 = vadd.f32 %v266, %v267
        %v269 = vrot.slane %v268, 2
        %v270 = vadd.f32 %v268, %v269
        %v271 = vrot.slane %v270, 1
        %v272 = vadd.f32 %v270, %v271
        %s273 = vtos %v272
        %v274 = vrcp.pop 1024.0
        %s275 = vtos %v274
        %s276 = smul.f32 %s273, %s275
        %v277 = vmul.f32 %v259, %v259
        %v278 = vmul.f32 %v260, %v260
        %v279 = vsel %vm261, %v277, 0.0
        %v280 = vsel %vm261, %v278, 0.0
        %v281 = vadd.f32 %v279, %v280
        %282 = vadd.xlane.f32.xlu0 %v281
        %v283 = vpop.xlane.xlu0 %282
        %v284 = vrot.slane %v283, 4
        %v285 = vadd.f32 %v283, %v284
        %v286 = vrot.slane %v285, 2
        %v287 = vadd.f32 %v285, %v286
        %v288 = vrot.slane %v287, 1
        %v289 = vadd.f32 %v287, %v288
        %s290 = vtos %v289
        %v291 = vrcp.pop 1024.0
        %s292 = vtos %v291
        %s293 = smul.f32 %s290, %s292
        %s294 = smul.f32 %s276, %s276
        %s295 = ssub.f32 %s293, %s294
        %s296 = smax.f32 %s295, 0.0
        %v297 = vld [vmem:[#allocation7 + $0x12] sm:$0x1]
        %v298 = vld [vmem:[#allocation7 + $0x13] sm:$0x1]
        %v299 = vstv %s276
        %v300 = vsub.f32 %v259, %v299
        %v301 = vsub.f32 %v260, %v299
        %s302 = sadd.f32 %s296, 1e-05
        %v303 = vstv %s302
        %v304 = vrsqrt.pop %v303
        %s305 = vtos %v304
        %v306 = vstv %s305
        %v307 = vmul.f32 %v300, %v306
        %v308 = vmul.f32 %v301, %v306
        %v309 = vlaneseq
        %v310 = vshrl.u32 %v309, 7
        %v311 = vsub.s32 0, %v310
        %v312 = vrot.slane %v297, %v311
        %v313 = vmul.f32 %v307, %v312
        %v314 = vmul.f32 %v308, %v312
        %v315 = vlaneseq
        %v316 = vshrl.u32 %v315, 7
        %v317 = vsub.s32 0, %v316
        %v318 = vrot.slane %v298, %v317
        %v319 = vadd.f32 %v313, %v318
        %v320 = vadd.f32 %v314, %v318
        %v321 = vmul.f32 %v319, 0.5
        %v322 = vmul.f32 %v320, 0.5
        %v323 = vmul.f32 %v319, 0.70710677
        %v324 = vmul.f32 %v320, 0.70710677
        %v325 = verf.f32.pop %v323
        %v326 = verf.f32.pop %v324
        %v327 = vadd.f32 %v325, 1.0
        %v328 = vadd.f32 %v326, 1.0
        %v329 = vmul.f32 %v321, %v327
        %v330 = vmul.f32 %v322, %v328
        %vm333 = vcmask 1040384
        %v334 = vrot.slane %v329, 7
        %v335 = vrot.slane %v330, 7
        %v336 = vsel %vm333, %v334, %v335
        %v340 = vsel %vm333, 0.0, %v334
        %v341 = vsel %vm333, %v335, 0.0
        %vm344 = vcmask 1046528
        %v345 = vrot.slane %v340, 1
        %v346 = vrot.slane %v336, 1
        %v347 = vsel %vm344, %v345, %v346
        %v348 = vrot.slane %v341, 1
        %v349 = vsel %vm344, %v346, %v348
        %350 = vrot.lane.b32.xlu0 %v347, 64
        %v351 = vpop.permute.xlu0 %350
        %352 = vrot.lane.b32.xlu0 %v349, 64
        %v353 = vpop.permute.xlu0 %352
        %vm356 = vcmask 1045504
        %v357 = vrot.slane %v340, 2
        %v358 = vrot.slane %v336, 2
        %v359 = vsel %vm356, %v357, %v358
        %v360 = vrot.slane %v341, 2
        %v361 = vsel %vm356, %v358, %v360
        %v362 = vsel %vm261, %v340, %v351
        %v363 = vsel %vm261, %v336, %v353
        %v364 = vld [vmem:[#allocation5] sm:$0xff]
        %v365 = vld [vmem:[#allocation5 + $0x8] sm:$0xff]
        %v366 = vld [vmem:[#allocation5 + $0x10] sm:$0xff]
        %v367 = vld [vmem:[#allocation5 + $0x18] sm:$0xff]
        %v368 = vld [vmem:[#allocation5 + $0x20] sm:$0xff]
        %v369 = vld [vmem:[#allocation5 + $0x28] sm:$0xff]
        %v370 = vld [vmem:[#allocation5 + $0x30] sm:$0xff]
        %v371 = vld [vmem:[#allocation5 + $0x38] sm:$0xff]
        %v372 = vld [vmem:[#allocation5 + $0x40] sm:$0xff]
        %v373 = vld [vmem:[#allocation5 + $0x48] sm:$0xff]
        %v374 = vld [vmem:[#allocation5 + $0x50] sm:$0xff]
        %v375 = vld [vmem:[#allocation5 + $0x58] sm:$0xff]
        %v376 = vld [vmem:[#allocation5 + $0x60] sm:$0xff]
        %v377 = vld [vmem:[#allocation5 + $0x68] sm:$0xff]
        %v378 = vld [vmem:[#allocation5 + $0x70] sm:$0xff]
        %v379 = vld [vmem:[#allocation5 + $0x78] sm:$0xff]
        %v380 = vld [vmem:[#allocation5 + $0x80] sm:$0xff]
        %v381 = vld [vmem:[#allocation5 + $0x88] sm:$0xff]
        %v382 = vld [vmem:[#allocation5 + $0x90] sm:$0xff]
        %v383 = vld [vmem:[#allocation5 + $0x98] sm:$0xff]
        %v384 = vld [vmem:[#allocation5 + $0xa0] sm:$0xff]
        %v385 = vld [vmem:[#allocation5 + $0xa8] sm:$0xff]
        %v386 = vld [vmem:[#allocation5 + $0xb0] sm:$0xff]
        %v387 = vld [vmem:[#allocation5 + $0xb8] sm:$0xff]
        %v388 = vld [vmem:[#allocation7 + $0x14] sm:$0x1]
        %v389 = vlaneseq
        %v390 = vshrl.u32 %v389, 7
        %v391 = vsub.s32 0, %v390
        %v392 = vrot.slane %v388, %v391
        %v393 = vsel %vm261, %v359, 0
        %v395 = vsel %vm261, %v361, 0
        %397 = vmatprep.subr.mxu0 0.0
        %398 = vmatpush1.msra.mxu0 %v364
        %399 = vmatprep.subr.mxu0 0.0
        %400 = vmatpush1.msra.mxu0 %v365
        %401 = vmatprep.subr.mxu0 0.0
        %402 = vmatpush1.msra.mxu0 %v366
        %403 = vmatprep.subr.mxu0 0.0
        %404 = vmatpush1.msra.mxu0 %v367
        %405 = vmatprep.subr.mxu0 0.0
        %406 = vmatpush1.msra.mxu0 %v368
        %407 = vmatprep.subr.mxu0 0.0
        %408 = vmatpush1.msra.mxu0 %v369
        %409 = vmatprep.subr.mxu0 0.0
        %410 = vmatpush1.msra.mxu0 %v370
        %411 = vmatprep.subr.mxu0 0.0
        %412 = vmatpush1.msra.mxu0 %v371
        %413 = vmatprep.subr.mxu0 0.0
        %414 = vmatpush1.msra.mxu0 %v372
        %415 = vmatprep.subr.mxu0 0.0
        %416 = vmatpush1.msra.mxu0 %v373
        %417 = vmatprep.subr.mxu0 0.0
        %418 = vmatpush1.msra.mxu0 %v374
        %419 = vmatprep.subr.mxu0 0.0
        %420 = vmatpush1.msra.mxu0 %v375
        %421 = vmatprep.subr.mxu0 0.0
        %422 = vmatpush1.msra.mxu0 %v376
        %423 = vmatprep.subr.mxu0 0.0
        %424 = vmatpush1.msra.mxu0 %v377
        %425 = vmatprep.subr.mxu0 0.0
        %426 = vmatpush1.msra.mxu0 %v378
        %427 = vmatprep.subr.mxu0 0.0
        %428 = vmatpush1.msra.mxu0 %v379
        %429 = vmatprep.subr.mxu0 0.0
        %430 = vmatpush1.msra.mxu0 %v380
        %431 = vmatprep.subr.mxu0 0.0
        %432 = vmatpush1.msra.mxu0 %v381
        %433 = vmatprep.subr.mxu0 0.0
        %434 = vmatpush1.msra.mxu0 %v382
        %435 = vmatprep.subr.mxu0 0.0
        %436 = vmatpush1.msra.mxu0 %v383
        %437 = vmatprep.subr.mxu0 0.0
        %438 = vmatpush1.msra.mxu0 %v384
        %439 = vmatprep.subr.mxu0 0.0
        %440 = vmatpush1.msra.mxu0 %v385
        %441 = vmatprep.subr.mxu0 0.0
        %442 = vmatpush1.msra.mxu0 %v386
        %443 = vmatprep.subr.mxu0 0.0
        %444 = vmatpush1.msra.mxu0 %v387
        %445 = vmatprep.subr.mxu0 0.0
        %446 = vmatpush1.msra.mxu0 0.0
        %447 = vmatprep.subr.mxu0 0.0
        %448 = vmatpush1.msra.mxu0 0.0
        %449 = vmatprep.subr.mxu0 0.0
        %450 = vmatpush1.msra.mxu0 0.0
        %451 = vmatprep.subr.mxu0 0.0
        %452 = vmatpush1.msra.mxu0 0.0
        %453 = vmatprep.subr.mxu0 0.0
        %454 = vmatpush1.msra.mxu0 0.0
        %455 = vmatprep.subr.mxu0 0.0
        %456 = vmatpush1.msra.mxu0 0.0
        %457 = vmatprep.subr.mxu0 0.0
        %458 = vmatpush1.msra.mxu0 0.0
        %459 = vmatprep.subr.mxu0 0.0
        %460 = vmatpush1.msra.mxu0 0.0
        %461 = vmatprep.mubr.f32.mxu0 %v393
        %462 = vmatmul.mubr.f32.gmra.mrb[0].mxu0 %v362
        %v463 = vpop.f32.mrb[0].mxu0
        %v464 = vadd.f32 %v392, %v463
        %v465 = vpop.f32.mrb[0].mxu0
        %466 = vmatprep.mubr.f32.mxu0 %v395
        %467 = vmatmul.mubr.f32.gmra.mrb[0].mxu0 %v363
        %v468 = vpop.f32.mrb[0].mxu0
        %v469 = vadd.f32 %v392, %v468
        %v470 = vpop.f32.mrb[0].mxu0
        %471 = vdwg.mxu0
        %v472 = vld [vmem:[%s258] sm:$0x1]
        %v473 = vld [vmem:[#allocation7] sm:$0xff]
        %v474 = vld [vmem:[#allocation7 + $0x10] sm:$0x1]
        %vm475 = vcmask 64512
        %v477 = vsel %vm475, %v472, 0
        %479 = vmatprep.subr.mxu0 0.0
        %480 = vmatpush1.msra.mxu0 %v473
        %481 = vmatprep.subr.mxu0 0.0
        %482 = vmatpush1.msra.mxu0 0.0
        %483 = vmatprep.subr.mxu0 0.0
        %484 = vmatpush1.msra.mxu0 0.0
        %485 = vmatprep.subr.mxu0 0.0
        %486 = vmatpush1.msra.mxu0 0.0
        %487 = vmatprep.subr.mxu0 0.0
        %488 = vmatpush1.msra.mxu0 0.0
        %489 = vmatprep.subr.mxu0 0.0
        %490 = vmatpush1.msra.mxu0 0.0
        %491 = vmatprep.subr.mxu0 0.0
        %492 = vmatpush1.msra.mxu0 0.0
        %493 = vmatprep.subr.mxu0 0.0
        %494 = vmatpush1.msra.mxu0 0.0
        %495 = vmatprep.subr.mxu0 0.0
        %496 = vmatpush1.msra.mxu0 0.0
        %497 = vmatprep.subr.mxu0 0.0
        %498 = vmatpush1.msra.mxu0 0.0
        %499 = vmatprep.subr.mxu0 0.0
        %500 = vmatpush1.msra.mxu0 0.0
        %501 = vmatprep.subr.mxu0 0.0
        %502 = vmatpush1.msra.mxu0 0.0
        %503 = vmatprep.subr.mxu0 0.0
        %504 = vmatpush1.msra.mxu0 0.0
        %505 = vmatprep.subr.mxu0 0.0
        %506 = vmatpush1.msra.mxu0 0.0
        %507 = vmatprep.subr.mxu0 0.0
        %508 = vmatpush1.msra.mxu0 0.0
        %509 = vmatprep.subr.mxu0 0.0
        %510 = vmatpush1.msra.mxu0 0.0
        %511 = vmatprep.subr.mxu0 0.0
        %512 = vmatpush1.msra.mxu0 0.0
        %513 = vmatprep.subr.mxu0 0.0
        %514 = vmatpush1.msra.mxu0 0.0
        %515 = vmatprep.subr.mxu0 0.0
        %516 = vmatpush1.msra.mxu0 0.0
        %517 = vmatprep.subr.mxu0 0.0
        %518 = vmatpush1.msra.mxu0 0.0
        %519 = vmatprep.subr.mxu0 0.0
        %520 = vmatpush1.msra.mxu0 0.0
        %521 = vmatprep.subr.mxu0 0.0
        %522 = vmatpush1.msra.mxu0 0.0
        %523 = vmatprep.subr.mxu0 0.0
        %524 = vmatpush1.msra.mxu0 0.0
        %525 = vmatprep.subr.mxu0 0.0
        %526 = vmatpush1.msra.mxu0 0.0
        %527 = vmatprep.subr.mxu0 0.0
        %528 = vmatpush1.msra.mxu0 0.0
        %529 = vmatprep.subr.mxu0 0.0
        %530 = vmatpush1.msra.mxu0 0.0
        %531 = vmatprep.subr.mxu0 0.0
        %532 = vmatpush1.msra.mxu0 0.0
        %533 = vmatprep.subr.mxu0 0.0
        %534 = vmatpush1.msra.mxu0 0.0
        %535 = vmatprep.subr.mxu0 0.0
        %536 = vmatpush1.msra.mxu0 0.0
        %537 = vmatprep.subr.mxu0 0.0
        %538 = vmatpush1.msra.mxu0 0.0
        %539 = vmatprep.subr.mxu0 0.0
        %540 = vmatpush1.msra.mxu0 0.0
        %541 = vmatprep.subr.mxu0 0.0
        %542 = vmatpush1.msra.mxu0 0.0
        %543 = vmatprep.mubr.f32.mxu0 0.0
        %544 = vmatmul.mubr.f32.gmra.mrb[0].mxu0 %v477
        %v545 = vpop.f32.mrb[0].mxu0
        %v546 = vadd.f32 %v474, %v545
        %v547 = vpop.f32.mrb[0].mxu0
        %548 = vdwg.mxu0
        %v549 = vld [vmem:[#allocation7 + $0x8] sm:$0xff]
        %v550 = vld [vmem:[#allocation7 + $0x11] sm:$0x1]
        %551 = vmatprep.subr.mxu0 0.0
        %552 = vmatpush1.msra.mxu0 %v549
        %553 = vmatprep.subr.mxu0 0.0
        %554 = vmatpush1.msra.mxu0 0.0
        %555 = vmatprep.subr.mxu0 0.0
        %556 = vmatpush1.msra.mxu0 0.0
        %557 = vmatprep.subr.mxu0 0.0
        %558 = vmatpush1.msra.mxu0 0.0
        %559 = vmatprep.subr.mxu0 0.0
        %560 = vmatpush1.msra.mxu0 0.0
        %561 = vmatprep.subr.mxu0 0.0
        %562 = vmatpush1.msra.mxu0 0.0
        %563 = vmatprep.subr.mxu0 0.0
        %564 = vmatpush1.msra.mxu0 0.0
        %565 = vmatprep.subr.mxu0 0.0
        %566 = vmatpush1.msra.mxu0 0.0
        %567 = vmatprep.subr.mxu0 0.0
        %568 = vmatpush1.msra.mxu0 0.0
        %569 = vmatprep.subr.mxu0 0.0
        %570 = vmatpush1.msra.mxu0 0.0
        %571 = vmatprep.subr.mxu0 0.0
        %572 = vmatpush1.msra.mxu0 0.0
        %573 = vmatprep.subr.mxu0 0.0
        %574 = vmatpush1.msra.mxu0 0.0
        %575 = vmatprep.subr.mxu0 0.0
        %576 = vmatpush1.msra.mxu0 0.0
        %577 = vmatprep.subr.mxu0 0.0
        %578 = vmatpush1.msra.mxu0 0.0
        %579 = vmatprep.subr.mxu0 0.0
        %580 = vmatpush1.msra.mxu0 0.0
        %581 = vmatprep.subr.mxu0 0.0
        %582 = vmatpush1.msra.mxu0 0.0
        %583 = vmatprep.subr.mxu0 0.0
        %584 = vmatpush1.msra.mxu0 0.0
        %585 = vmatprep.subr.mxu0 0.0
        %586 = vmatpush1.msra.mxu0 0.0
        %587 = vmatprep.subr.mxu0 0.0
        %588 = vmatpush1.msra.mxu0 0.0
        %589 = vmatprep.subr.mxu0 0.0
        %590 = vmatpush1.msra.mxu0 0.0
        %591 = vmatprep.subr.mxu0 0.0
        %592 = vmatpush1.msra.mxu0 0.0
        %593 = vmatprep.subr.mxu0 0.0
        %594 = vmatpush1.msra.mxu0 0.0
        %595 = vmatprep.subr.mxu0 0.0
        %596 = vmatpush1.msra.mxu0 0.0
        %597 = vmatprep.subr.mxu0 0.0
        %598 = vmatpush1.msra.mxu0 0.0
        %599 = vmatprep.subr.mxu0 0.0
        %600 = vmatpush1.msra.mxu0 0.0
        %601 = vmatprep.subr.mxu0 0.0
        %602 = vmatpush1.msra.mxu0 0.0
        %603 = vmatprep.subr.mxu0 0.0
        %604 = vmatpush1.msra.mxu0 0.0
        %605 = vmatprep.subr.mxu0 0.0
        %606 = vmatpush1.msra.mxu0 0.0
        %607 = vmatprep.subr.mxu0 0.0
        %608 = vmatpush1.msra.mxu0 0.0
        %609 = vmatprep.subr.mxu0 0.0
        %610 = vmatpush1.msra.mxu0 0.0
        %611 = vmatprep.subr.mxu0 0.0
        %612 = vmatpush1.msra.mxu0 0.0
        %613 = vmatprep.subr.mxu0 0.0
        %614 = vmatpush1.msra.mxu0 0.0
        %615 = vmatprep.mubr.f32.mxu0 0.0
        %616 = vmatmul.mubr.f32.gmra.mrb[0].mxu0 %v477
        %v617 = vpop.f32.mrb[0].mxu0
        %v618 = vadd.f32 %v550, %v617
        %v619 = vpop.f32.mrb[0].mxu0
        %620 = vdwg.mxu0
        %v621 = vadd.f32 %v464, %v469
        %622 = vadd.xlane.f32.xlu0 %v621
        %v623 = vpop.xlane.xlu0 %622
        %v624 = vrot.slane %v623, 4
        %v625 = vadd.f32 %v623, %v624
        %v626 = vrot.slane %v625, 2
        %v627 = vadd.f32 %v625, %v626
        %v628 = vrot.slane %v627, 1
        %v629 = vadd.f32 %v627, %v628
        %s630 = vtos %v629
        %v631 = vrcp.pop 2048.0
        %s632 = vtos %v631
        %s633 = smul.f32 %s630, %s632
        %v634 = vmul.f32 %v464, %v464
        %v635 = vmul.f32 %v469, %v469
        %v636 = vadd.f32 %v634, %v635
        %637 = vadd.xlane.f32.xlu0 %v636
        %v638 = vpop.xlane.xlu0 %637
        %v639 = vrot.slane %v638, 4
        %v640 = vadd.f32 %v638, %v639
        %v641 = vrot.slane %v640, 2
        %v642 = vadd.f32 %v640, %v641
        %v643 = vrot.slane %v642, 1
        %v644 = vadd.f32 %v642, %v643
        %s645 = vtos %v644
        %v646 = vrcp.pop 2048.0
        %s647 = vtos %v646
        %s648 = smul.f32 %s645, %s647
        %s649 = smul.f32 %s633, %s633
        %s650 = ssub.f32 %s648, %s649
        %s651 = smax.f32 %s650, 0.0
        %v652 = vstv %s633
        %v653 = vsub.f32 %v464, %v652
        %v654 = vsub.f32 %v469, %v652
        %s655 = sadd.f32 %s651, 1e-05
        %v656 = vstv %s655
        %v657 = vrsqrt.pop %v656
        %s658 = vtos %v657
        %v659 = vstv %s658
        %v660 = vmul.f32 %v653, %v659
        %v661 = vmul.f32 %v654, %v659
        %v662 = vld [vmem:[#allocation7 + $0x15] sm:$0x1]
        %v663 = vlaneseq
        %v664 = vshrl.u32 %v663, 7
        %v665 = vsub.s32 0, %v664
        %v666 = vrot.slane %v662, %v665
        %v667 = vmul.f32 %v660, %v666
        %v668 = vmul.f32 %v661, %v666
        %v669 = vld [vmem:[#allocation7 + $0x16] sm:$0x1]
        %v670 = vlaneseq
        %v671 = vshrl.u32 %v670, 7
        %v672 = vsub.s32 0, %v671
        %v673 = vrot.slane %v669, %v672
        %v674 = vadd.f32 %v667, %v673
        %v675 = vadd.f32 %v668, %v673
        %v676 = vlaneseq
        %v677 = vshrl.u32 %v676, 7
        %v678 = vsub.s32 0, %v677
        %v679 = vrot.slane %v546, %v678
        %v680 = vmul.f32 %v674, %v679
        %v681 = vmul.f32 %v675, %v679
        %v682 = vlaneseq
        %v683 = vshrl.u32 %v682, 7
        %v684 = vsub.s32 0, %v683
        %v685 = vrot.slane %v618, %v684
        %v686 = vadd.f32 %v680, %v685
        %v687 = vadd.f32 %v681, %v685
        %v688 = vmul.f32 %v686, 0.5
        %v689 = vmul.f32 %v687, 0.5
        %v690 = vmul.f32 %v686, 0.70710677
        %v691 = vmul.f32 %v687, 0.70710677
        %v692 = verf.f32.pop %v690
        %v693 = verf.f32.pop %v691
        %v694 = vadd.f32 %v692, 1.0
        %v695 = vadd.f32 %v693, 1.0
        %v696 = vmul.f32 %v688, %v694
        %v697 = vmul.f32 %v689, %v695
        %v700 = vrot.slane %v696, 7
        %v701 = vrot.slane %v697, 7
        %v702 = vsel %vm333, %v700, %v701
        %v706 = vsel %vm333, 0.0, %v700
        %v707 = vsel %vm333, %v701, 0.0
        %v710 = vrot.slane %v706, 1
        %v711 = vrot.slane %v702, 1
        %v712 = vsel %vm344, %v710, %v711
        %v713 = vrot.slane %v707, 1
        %v714 = vsel %vm344, %v711, %v713
        %v717 = vrot.slane %v706, 2
        %v718 = vrot.slane %v702, 2
        %v719 = vsel %vm356, %v717, %v718
        %v720 = vrot.slane %v707, 2
        %v721 = vsel %vm356, %v718, %v720
        %v724 = vld [vmem:[#allocation5 + $0xc0] sm:$0xff]
        %v725 = vld [vmem:[#allocation5 + $0xc8] sm:$0xff]
        %v726 = vld [vmem:[#allocation5 + $0xd0] sm:$0xff]
        %v727 = vld [vmem:[#allocation5 + $0xd8] sm:$0xff]
        %v728 = vld [vmem:[#allocation5 + $0xe0] sm:$0xff]
        %v729 = vld [vmem:[#allocation5 + $0xe8] sm:$0xff]
        %v730 = vld [vmem:[#allocation5 + $0xf0] sm:$0xff]
        %v731 = vld [vmem:[#allocation5 + $0xf8] sm:$0xff]
        %v732 = vld [vmem:[#allocation5 + $0x100] sm:$0xff]
        %v733 = vld [vmem:[#allocation5 + $0x108] sm:$0xff]
        %v734 = vld [vmem:[#allocation5 + $0x110] sm:$0xff]
        %v735 = vld [vmem:[#allocation5 + $0x118] sm:$0xff]
        %v736 = vld [vmem:[#allocation5 + $0x120] sm:$0xff]
        %v737 = vld [vmem:[#allocation5 + $0x128] sm:$0xff]
        %v738 = vld [vmem:[#allocation5 + $0x130] sm:$0xff]
        %v739 = vld [vmem:[#allocation5 + $0x138] sm:$0xff]
        %v740 = vld [vmem:[#allocation5 + $0x140] sm:$0xff]
        %v741 = vld [vmem:[#allocation5 + $0x148] sm:$0xff]
        %v742 = vld [vmem:[#allocation5 + $0x150] sm:$0xff]
        %v743 = vld [vmem:[#allocation5 + $0x158] sm:$0xff]
        %v744 = vld [vmem:[#allocation5 + $0x160] sm:$0xff]
        %v745 = vld [vmem:[#allocation5 + $0x168] sm:$0xff]
        %v746 = vld [vmem:[#allocation5 + $0x170] sm:$0xff]
        %v747 = vld [vmem:[#allocation5 + $0x178] sm:$0xff]
        %v748 = vld [vmem:[#allocation5 + $0x180] sm:$0xff]
        %v749 = vld [vmem:[#allocation5 + $0x188] sm:$0xff]
        %v750 = vld [vmem:[#allocation5 + $0x190] sm:$0xff]
        %v751 = vld [vmem:[#allocation5 + $0x198] sm:$0xff]
        %v752 = vld [vmem:[#allocation5 + $0x1a0] sm:$0xff]
        %v753 = vld [vmem:[#allocation5 + $0x1a8] sm:$0xff]
        %v754 = vld [vmem:[#allocation5 + $0x1b0] sm:$0xff]
        %v755 = vld [vmem:[#allocation5 + $0x1b8] sm:$0xff]
        %v756 = vld [vmem:[#allocation5 + $0x1c0] sm:$0xff]
        %v757 = vld [vmem:[#allocation5 + $0x1c8] sm:$0xff]
        %v758 = vld [vmem:[#allocation5 + $0x1d0] sm:$0xff]
        %v759 = vld [vmem:[#allocation5 + $0x1d8] sm:$0xff]
        %v760 = vld [vmem:[#allocation5 + $0x1e0] sm:$0xff]
        %v761 = vld [vmem:[#allocation5 + $0x1e8] sm:$0xff]
        %v762 = vld [vmem:[#allocation5 + $0x1f0] sm:$0xff]
        %v763 = vld [vmem:[#allocation5 + $0x1f8] sm:$0xff]
        %v764 = vld [vmem:[#allocation5 + $0x200] sm:$0xff]
        %v765 = vld [vmem:[#allocation5 + $0x208] sm:$0xff]
        %v766 = vld [vmem:[#allocation5 + $0x210] sm:$0xff]
        %v767 = vld [vmem:[#allocation5 + $0x218] sm:$0xff]
        %v768 = vld [vmem:[#allocation5 + $0x220] sm:$0xff]
        %v769 = vld [vmem:[#allocation5 + $0x228] sm:$0xff]
        %v770 = vld [vmem:[#allocation5 + $0x230] sm:$0xff]
        %v771 = vld [vmem:[#allocation5 + $0x238] sm:$0xff]
        %v772 = vld [vmem:[#allocation5 + $0x240] sm:$0xff]
        %v773 = vld [vmem:[#allocation5 + $0x248] sm:$0xff]
        %v774 = vld [vmem:[#allocation5 + $0x250] sm:$0xff]
        %v775 = vld [vmem:[#allocation5 + $0x258] sm:$0xff]
        %v776 = vld [vmem:[#allocation5 + $0x260] sm:$0xff]
        %v777 = vld [vmem:[#allocation5 + $0x268] sm:$0xff]
        %v778 = vld [vmem:[#allocation5 + $0x270] sm:$0xff]
        %v779 = vld [vmem:[#allocation5 + $0x278] sm:$0xff]
        %v780 = vld [vmem:[#allocation7 + $0x17] sm:$0x1]
        %v781 = vlaneseq
        %v782 = vshrl.u32 %v781, 7
        %v783 = vsub.s32 0, %v782
        %v784 = vrot.slane %v780, %v783
        %v786 = vsel %vm261, %v259, 0
        %v789 = vsel %vm261, %v260, 0
        %791 = vmatprep.subr.mxu0 0.0
        %792 = vmatpush1.msra.mxu0 %v724
        %793 = vmatprep.subr.mxu0 0.0
        %794 = vmatpush1.msra.mxu0 %v725
        %795 = vmatprep.subr.mxu0 0.0
        %796 = vmatpush1.msra.mxu0 %v726
        %797 = vmatprep.subr.mxu0 0.0
        %798 = vmatpush1.msra.mxu0 %v727
        %799 = vmatprep.subr.mxu0 0.0
        %800 = vmatpush1.msra.mxu0 %v728
        %801 = vmatprep.subr.mxu0 0.0
        %802 = vmatpush1.msra.mxu0 %v729
        %803 = vmatprep.subr.mxu0 0.0
        %804 = vmatpush1.msra.mxu0 %v730
        %805 = vmatprep.subr.mxu0 0.0
        %806 = vmatpush1.msra.mxu0 %v731
        %807 = vmatprep.subr.mxu0 0.0
        %808 = vmatpush1.msra.mxu0 %v732
        %809 = vmatprep.subr.mxu0 0.0
        %810 = vmatpush1.msra.mxu0 %v733
        %811 = vmatprep.subr.mxu0 0.0
        %812 = vmatpush1.msra.mxu0 %v734
        %813 = vmatprep.subr.mxu0 0.0
        %814 = vmatpush1.msra.mxu0 %v735
        %815 = vmatprep.subr.mxu0 0.0
        %816 = vmatpush1.msra.mxu0 %v736
        %817 = vmatprep.subr.mxu0 0.0
        %818 = vmatpush1.msra.mxu0 %v737
        %819 = vmatprep.subr.mxu0 0.0
        %820 = vmatpush1.msra.mxu0 %v738
        %821 = vmatprep.subr.mxu0 0.0
        %822 = vmatpush1.msra.mxu0 %v739
        %823 = vmatprep.subr.mxu0 0.0
        %824 = vmatpush1.msra.mxu0 %v740
        %825 = vmatprep.subr.mxu0 0.0
        %826 = vmatpush1.msra.mxu0 %v741
        %827 = vmatprep.subr.mxu0 0.0
        %828 = vmatpush1.msra.mxu0 %v742
        %829 = vmatprep.subr.mxu0 0.0
        %830 = vmatpush1.msra.mxu0 %v743
        %831 = vmatprep.subr.mxu0 0.0
        %832 = vmatpush1.msra.mxu0 %v744
        %833 = vmatprep.subr.mxu0 0.0
        %834 = vmatpush1.msra.mxu0 %v745
        %835 = vmatprep.subr.mxu0 0.0
        %836 = vmatpush1.msra.mxu0 %v746
        %837 = vmatprep.subr.mxu0 0.0
        %838 = vmatpush1.msra.mxu0 %v747
        %839 = vmatprep.subr.mxu0 0.0
        %840 = vmatpush1.msra.mxu0 %v748
        %841 = vmatprep.subr.mxu0 0.0
        %842 = vmatpush1.msra.mxu0 %v749
        %843 = vmatprep.subr.mxu0 0.0
        %844 = vmatpush1.msra.mxu0 %v750
        %845 = vmatprep.subr.mxu0 0.0
        %846 = vmatpush1.msra.mxu0 %v751
        %847 = vmatprep.subr.mxu0 0.0
        %848 = vmatpush1.msra.mxu0 %v752
        %849 = vmatprep.subr.mxu0 0.0
        %850 = vmatpush1.msra.mxu0 %v753
        %851 = vmatprep.subr.mxu0 0.0
        %852 = vmatpush1.msra.mxu0 %v754
        %853 = vmatprep.subr.mxu0 0.0
        %854 = vmatpush1.msra.mxu0 %v755
        %855 = vmatprep.mubr.f32.mxu0 %v712
        %856 = vmatmul.mubr.f32.gmra.mrb[0].mxu0 %v706
        %v857 = vpop.f32.mrb[0].mxu0
        %v858 = vadd.f32 %v784, %v857
        %v859 = vpop.f32.mrb[0].mxu0
        %860 = vmatprep.mubr.f32.mxu0 %v714
        %861 = vmatmul.mubr.f32.gmra.mrb[0].mxu0 %v702
        %v862 = vpop.f32.mrb[0].mxu0
        %v863 = vadd.f32 %v784, %v862
        %v864 = vpop.f32.mrb[0].mxu0
        %865 = vdwg.mxu0
        %866 = vmatprep.subr.mxu0 0.0
        %867 = vmatpush1.msra.mxu0 %v756
        %868 = vmatprep.subr.mxu0 0.0
        %869 = vmatpush1.msra.mxu0 %v757
        %870 = vmatprep.subr.mxu0 0.0
        %871 = vmatpush1.msra.mxu0 %v758
        %872 = vmatprep.subr.mxu0 0.0
        %873 = vmatpush1.msra.mxu0 %v759
        %874 = vmatprep.subr.mxu0 0.0
        %875 = vmatpush1.msra.mxu0 %v760
        %876 = vmatprep.subr.mxu0 0.0
        %877 = vmatpush1.msra.mxu0 %v761
        %878 = vmatprep.subr.mxu0 0.0
        %879 = vmatpush1.msra.mxu0 %v762
        %880 = vmatprep.subr.mxu0 0.0
        %881 = vmatpush1.msra.mxu0 %v763
        %882 = vmatprep.subr.mxu0 0.0
        %883 = vmatpush1.msra.mxu0 %v764
        %884 = vmatprep.subr.mxu0 0.0
        %885 = vmatpush1.msra.mxu0 %v765
        %886 = vmatprep.subr.mxu0 0.0
        %887 = vmatpush1.msra.mxu0 %v766
        %888 = vmatprep.subr.mxu0 0.0
        %889 = vmatpush1.msra.mxu0 %v767
        %890 = vmatprep.subr.mxu0 0.0
        %891 = vmatpush1.msra.mxu0 %v768
        %892 = vmatprep.subr.mxu0 0.0
        %893 = vmatpush1.msra.mxu0 %v769
        %894 = vmatprep.subr.mxu0 0.0
        %895 = vmatpush1.msra.mxu0 %v770
        %896 = vmatprep.subr.mxu0 0.0
        %897 = vmatpush1.msra.mxu0 %v771
        %898 = vmatprep.subr.mxu0 0.0
        %899 = vmatpush1.msra.mxu0 %v772
        %900 = vmatprep.subr.mxu0 0.0
        %901 = vmatpush1.msra.mxu0 %v773
        %902 = vmatprep.subr.mxu0 0.0
        %903 = vmatpush1.msra.mxu0 %v774
        %904 = vmatprep.subr.mxu0 0.0
        %905 = vmatpush1.msra.mxu0 %v775
        %906 = vmatprep.subr.mxu0 0.0
        %907 = vmatpush1.msra.mxu0 %v776
        %908 = vmatprep.subr.mxu0 0.0
        %909 = vmatpush1.msra.mxu0 %v777
        %910 = vmatprep.subr.mxu0 0.0
        %911 = vmatpush1.msra.mxu0 %v778
        %912 = vmatprep.subr.mxu0 0.0
        %913 = vmatpush1.msra.mxu0 %v779
        %914 = vmatprep.subr.mxu0 0.0
        %915 = vmatpush1.msra.mxu0 0.0
        %916 = vmatprep.subr.mxu0 0.0
        %917 = vmatpush1.msra.mxu0 0.0
        %918 = vmatprep.subr.mxu0 0.0
        %919 = vmatpush1.msra.mxu0 0.0
        %920 = vmatprep.subr.mxu0 0.0
        %921 = vmatpush1.msra.mxu0 0.0
        %922 = vmatprep.subr.mxu0 0.0
        %923 = vmatpush1.msra.mxu0 0.0
        %924 = vmatprep.subr.mxu0 0.0
        %925 = vmatpush1.msra.mxu0 0.0
        %926 = vmatprep.subr.mxu0 0.0
        %927 = vmatpush1.msra.mxu0 0.0
        %928 = vmatprep.subr.mxu0 0.0
        %929 = vmatpush1.msra.mxu0 0.0
        %930 = vmatprep.mubr.f32.mxu0 %v786
        %931 = vmatmul.mubr.f32.gmra.mrb[0].mxu0 %v719
        %v932 = vpop.f32.mrb[0].mxu0
        %v933 = vadd.f32 %v858, %v932
        %v934 = vpop.f32.mrb[0].mxu0
        %935 = vmatprep.mubr.f32.mxu0 %v789
        %936 = vmatmul.mubr.f32.gmra.mrb[0].mxu0 %v721
        %v937 = vpop.f32.mrb[0].mxu0
        %v938 = vadd.f32 %v863, %v937
        %v939 = vpop.f32.mrb[0].mxu0
        %940 = vdwg.mxu0
        %941 = vst [vmem:[%s255] sm:$0xff] %v933
        %942 = vst [vmem:[%s255 + $0x8] sm:$0xff] %v938
        %s943 = sand.u32 %s124, 1
        %s944 = scalar_lea.sflag [#allocation4], %s943
        %s945 = sand.u32 %s124, 1
        %s946 = smul.addr %s945, 16
        %s947 = scalar_lea.vmem [#allocation8], %s946
        // Predicated region
        $region49: #{tpu_custom_call.1} parent=35 // pred_check
          %p948 = pneg %p134
        $region50: #{tpu_custom_call.1} parent=35 // pred_check_branch
          %950 = sbr.rel (%p948) target = $region52
        $region51: #{tpu_custom_call.1} parent=35 // pred_region
          %s952 = ssub.s32 256, 256
          %953 = vsyncadd %s944, %s952
          %s954 = smul.addr %s22, 2
          %s955 = smul.addr %s954, 128
          %s956 = scalar_lea.hbm %s4, %s955
          %s957 = sshll.u32 %s947, 4
          %s958 = int_to_ptr.vmem [resolvable:$true] %s957
          %963 = dma.vmem_to_hbm [thread:$0]  %s958, 256, %s956, %s944, 128, 128, 8
        $region52: #{tpu_custom_call.1} parent=35 // pred_fallthru
          _
      $region36: #{tpu_custom_call.1} parent=5 // pred_fallthru
        _
      %p964 = scmp.le.s32.totalorder 2, %s17
      // Predicated region
      $region53: #{tpu_custom_call.1} parent=5 // pred_check
        %p965 = pneg %p964
      $region54: #{tpu_custom_call.1} parent=5 // pred_check_branch
        %967 = sbr.rel (%p965) target = $region56
      $region55: #{tpu_custom_call.1} parent=5 // pred_region
        %s968 = ssub.s32 %s17, 2
        // Predicated region
        $region57: #{tpu_custom_call.1} parent=55 // pred_check
          %p969 = pneg %p140
        $region58: #{tpu_custom_call.1} parent=55 // pred_check_branch
          %971 = sbr.rel (%p969) target = $region60
        $region59: #{tpu_custom_call.1} parent=55 // pred_region
          %s972 = sand.u32 %s125, 1
          %s973 = scalar_lea.sflag [#allocation4], %s972
          %s974 = sand.u32 %s125, 1
          %s975 = smul.addr %s974, 16
          %s976 = scalar_lea.vmem [#allocation8], %s975
          %977 = dma.done %s973, 256
        $region60: #{tpu_custom_call.1} parent=55 // pred_fallthru
          _
      $region56: #{tpu_custom_call.1} parent=5 // pred_fallthru
        _
    $region6: #{tpu_custom_call.1} parent=1 // loop_footer
      %s21 = sadd.s32 1, %s17
    $region7: #{tpu_custom_call.1} parent=1 // loop_footer_branch
      %16 = sbr.rel target = $region3
    $region8: #{tpu_custom_call.1} parent=1 // loop_exit
      _
    %978 = vsyncpa [#allocation3], 1
    %s979 = scalar_lea.sflag [#allocation3], 1
    %980 = vsyncpa %s979, 1
    %981 = vsyncpa [#allocation6], 1
    %982 = vsyncpa [#allocation4], 1
    %s983 = scalar_lea.sflag [#allocation4], 1
    %984 = vsyncpa %s983, 1

</llo_original>
